<compile_context>
chip_gen: v6e
topology: v6e:2x2x1
jax: 0.10.0
libtpu: 0.0.40
codegen_flags: <defaults>
</compile_context>

<pallas_src>
import jax
import jax.numpy as jnp
from jax.experimental import pallas as pl
from jax.experimental.pallas import tpu as pltpu


# ----------------------------------------------------------------------------
# Pallas kernel: out = x * noise  (noise already scaled by 1/survival_rate)
# ----------------------------------------------------------------------------
def _stochastic_depth_kernel(x_ref, noise_ref, o_ref):
    # x_ref:     (TN, TILE_F)  VMEM tile of the flattened input
    # noise_ref: (TN, 1)       per-row keep/scale factor
    # o_ref:     (TN, TILE_F)
    o_ref[...] = x_ref[...] * noise_ref[...]


def _round_up(v: int, m: int) -> int:
    return (v + m - 1) // m * m


def _choose_tiles(N: int, F: int, itemsize: int):
    """Pick (TN, TILE_F): big lane-dense blocks under a per-block byte budget."""
    max_block_bytes = 4 * 1024 * 1024  # 4 MiB per block (in + out double-buffered
                                       # => <= ~17 MiB pipelined; safe on v7x too)
    # Sublane tile: whole batch if small (block dim == full array dim is always
    # legal), otherwise a fixed multiple of 8 with a masked ragged last block.
    tn = N if N <= 256 else 256
    # Widest lane tile (multiple of 128) that fits the budget with this TN.
    lanes_budget = max(128, (max_block_bytes // (max(tn, 1) * itemsize)) // 128 * 128)
    tile_f = min(_round_up(F, 128), 4096, lanes_budget)
    return tn, tile_f


def _stochastic_depth_pallas(x_flat: jax.Array, noise: jax.Array) -> jax.Array:
    """x_flat: (N, F).  noise: (N, 1) keep/scale column."""
    N, F = x_flat.shape
    itemsize = jnp.dtype(x_flat.dtype).itemsize
    tn, tile_f = _choose_tiles(N, F, itemsize)

    grid = (pl.cdiv(N, tn), pl.cdiv(F, tile_f))

    block_bytes = tn * tile_f * itemsize
    # 2 input bufs + 2 output bufs + noise + slack; floor at the v5e default.
    vmem_limit = max(4 * block_bytes + (1 << 20), 16 * 1024 * 1024)

    return pl.pallas_call(
        _stochastic_depth_kernel,
        out_shape=jax.ShapeDtypeStruct((N, F), x_flat.dtype),
        grid_spec=pltpu.PrefetchScalarGridSpec(
            num_scalar_prefetch=0,
            grid=grid,
            in_specs=[
                pl.BlockSpec((tn, tile_f), lambda i, j: (i, j)),
                pl.BlockSpec((tn, 1), lambda i, j: (i, 0)),
            ],
            out_specs=pl.BlockSpec((tn, tile_f), lambda i, j: (i, j)),
        ),
        compiler_params=pltpu.CompilerParams(
            dimension_semantics=("parallel", "parallel"),
            vmem_limit_bytes=vmem_limit,
        ),
    )(x_flat, noise)


# ----------------------------------------------------------------------------
# Wrapper reproducing StochasticDepth.forward semantics
# ----------------------------------------------------------------------------
def stochastic_depth(x: jax.Array,
                     p: float,
                     mode: str,
                     training: bool = True,
                     *,
                     key: jax.Array) -> jax.Array:
    if p < 0.0 or p > 1.0:
        raise ValueError(
            f"drop probability has to be between 0 and 1, but got {p}")
    if mode not in ["batch", "row"]:
        raise ValueError(
            f"mode has to be either 'batch' or 'row', but got {mode}")
    if not training or p == 0.0:
        return x

    survival_rate = 1.0 - p
    N = x.shape[0]

    # Bernoulli noise (same semantics as torch.empty(size).bernoulli_(sr)).
    if mode == "row":
        noise = jax.random.bernoulli(key, survival_rate, (N, 1)).astype(x.dtype)
    else:  # "batch": one draw shared by the whole batch (tiny N*itemsize array)
        draw = jax.random.bernoulli(key, survival_rate, (1, 1)).astype(x.dtype)
        noise = jnp.broadcast_to(draw, (N, 1))
    if survival_rate > 0.0:
        noise = noise / jnp.asarray(survival_rate, dtype=x.dtype)

    # Flatten per-sample features (free reshape, no pad: ragged last lane
    # block is masked by Pallas).
    flat = x.reshape(N, -1)
    out_flat = _stochastic_depth_pallas(flat, noise)
    return out_flat.reshape(x.shape)


class StochasticDepth:
    """JAX/Pallas port of the PyTorch StochasticDepth module."""

    def __init__(self, p: float, mode: str) -> None:
        self.p = p
        self.mode = mode
        self.training = True

    def __call__(self, x: jax.Array, *, key: jax.Array) -> jax.Array:
        return stochastic_depth(x, self.p, self.mode, self.training, key=key)


# ----------------------------------------------------------------------------
# Demo / self-check
# ----------------------------------------------------------------------------
if __name__ == "__main__":
    import numpy as np

    key = jax.random.PRNGKey(0)
    k_x, k_noise = jax.random.split(key)

    # NCHW input, as in the ConvNeXt residual branch.
    x = jax.random.normal(k_x, (2, 4, 16, 16), dtype=jnp.float32)

    # Training-mode, row-wise stochastic depth with drop prob 0.2.
    module = StochasticDepth(p=0.2, mode="row")
    out = module(x, key=k_noise)
    out = jax.block_until_ready(out)
    assert out.shape == x.shape and out.dtype == x.dtype

    # Reference check: each row is either x / survival_rate or exactly zero.
    survival = 1.0 - module.p
    out_np = jax.device_get(out)
    x_np = jax.device_get(x)
    for n in range(x_np.shape[0]):
        kept = np.allclose(out_np[n], x_np[n] / survival, rtol=1e-6, atol=1e-6)
        dropped = np.allclose(out_np[n], 0.0)
        assert kept or dropped, "row is neither kept nor dropped"

    # Batch mode: whole batch either kept (scaled) or dropped.
    module_b = StochasticDepth(p=0.5, mode="batch")
    out_b = jax.block_until_ready(module_b(x, key=k_noise))
    out_b_np = jax.device_get(out_b)
    kept_b = np.allclose(out_b_np, x_np / 0.5, rtol=1e-6, atol=1e-6)
    dropped_b = np.allclose(out_b_np, 0.0)
    assert out_b.shape == x.shape and (kept_b or dropped_b)

    # Eval-mode passthrough.
    module_eval = StochasticDepth(p=0.9, mode="row")
    module_eval.training = False
    out_eval = jax.block_until_ready(module_eval(x, key=k_noise))
    assert np.allclose(jax.device_get(out_eval), x_np)

    print("KERNEL_OK")
</pallas_src>

<mosaic_0001>
module attributes {stable_mosaic.version = 11 : i64} {
  func.func @_stochastic_depth_kernel(%arg0: i32, %arg1: i32, %arg2: memref<2x1024xf32, #tpu.memory_space<vmem>>, %arg3: memref<2x1xf32, #tpu.memory_space<vmem>>, %arg4: memref<2x1024xf32, #tpu.memory_space<vmem>>) attributes {dimension_semantics = [#tpu.dimension_semantics<parallel>, #tpu.dimension_semantics<parallel>], iteration_bounds = array<i64: 1, 1>, scalar_prefetch = 0 : i64, scratch_operands = 0 : i64, tpu.core_type = #tpu.core_type<tc>, window_params = [{transform_indices = @transform_0, window_bounds = array<i64: 2, 1024>}, {transform_indices = @transform_1, window_bounds = array<i64: 2, 1>}, {transform_indices = @transform_2, window_bounds = array<i64: 2, 1024>}]} {
    %c0 = arith.constant 0 : index
    %c0_0 = arith.constant 0 : index
    %0 = vector.load %arg2[%c0, %c0_0] : memref<2x1024xf32, #tpu.memory_space<vmem>>, vector<2x1024xf32>
    %c0_1 = arith.constant 0 : index
    %c0_2 = arith.constant 0 : index
    %1 = vector.load %arg3[%c0_1, %c0_2] : memref<2x1xf32, #tpu.memory_space<vmem>>, vector<2x1xf32>
    %2 = vector.broadcast %1 : vector<2x1xf32> to vector<2x1024xf32>
    %3 = arith.mulf %0, %2 : vector<2x1024xf32>
    %c0_3 = arith.constant 0 : index
    %c0_4 = arith.constant 0 : index
    %4 = vector.load %arg4[%c0_3, %c0_4] : memref<2x1024xf32, #tpu.memory_space<vmem>>, vector<2x1024xf32>
    tpu.vector_store %arg4[%c0_3, %c0_4], %3 {strides = array<i32>} : memref<2x1024xf32, #tpu.memory_space<vmem>>, vector<2x1024xf32>,
    return
  }
  func.func @transform_0(%arg0: i32, %arg1: i32) -> (i32, i32) {
    %c0_i32 = arith.constant 0 : i32
    return %arg0, %arg1 : i32, i32
  }
  func.func @transform_1(%arg0: i32, %arg1: i32) -> (i32, i32) {
    %c0_i32 = arith.constant 0 : i32
    %c0_i32_0 = arith.constant 0 : i32
    return %arg0, %c0_i32 : i32, i32
  }
  func.func @transform_2(%arg0: i32, %arg1: i32) -> (i32, i32) {
    %c0_i32 = arith.constant 0 : i32
    return %arg0, %arg1 : i32, i32
  }
}

</mosaic_0001>

<llo_original>
// kernel: tpu_custom_call.1
$region0: #{tpu_custom_call.1}
  #allocation0 [shape = 'u32[]', space=smem, size = 0x4, offset = 0x4, fixed_abs, tag = 'smem constant byte address 0x4 - core index']
  #allocation1 [shape = 'u32[144,128]{1,0:T(1,128)}', space=vmem, size = 0x12000, scoped, tag = 'internal scratch']
  %s0 = inlined_call_operand.hbm [shape: f32[2,1024], index: 0, kind: input, shape index: {}]
  %s1 = inlined_call_operand.vmem [shape: f32[2,1], index: 1, kind: input, shape index: {}]
  %s2 = inlined_call_operand.hbm [shape: f32[2,1024], index: 2, kind: output, shape index: {}]
  %s3 = sld [smem:[#allocation0]]
  $region22: #{tpu_custom_call.1} parent=0
    _
  %s5 = ssub.s32 1, %s3
  %s6 = scalar_select 0, %s5, %s3
  $region1: #{tpu_custom_call.1} parent=0
    #allocation2 [shape = 'u8[8192]{0}', space=vmem, size = 0x2000, scoped, tag = 'input window, operand 0, single buffered']
    #allocation3 [shape = 's32[1]{0}', space=sflag, size = 0x4, scoped, tag = 'scoped memory for tpu_custom_call.1']
    #allocation4 [shape = 's32[1]{0}', space=sflag, size = 0x4, scoped, tag = 'scoped memory for tpu_custom_call.1']
    #allocation5 [shape = 'u8[8192]{0}', space=vmem, size = 0x2000, scoped, tag = 'output window, operand 0, single buffered']
    %7 = vsyncpa [#allocation3], 0
    %8 = vsyncpa [#allocation4], 0
    // Predicated region
    $region2: #{tpu_custom_call.1} parent=1 // pred_check
      _
    $region3: #{tpu_custom_call.1} parent=1 // pred_check_branch
      %10 = sbr.rel (0) target = $region5
    $region4: #{tpu_custom_call.1} parent=1 // pred_region
      %s12 = ssub.s32 256, 256
      %13 = vsyncadd [#allocation3], %s12
      %s15 = sshll.u32 [#allocation2], 4
      %s16 = int_to_ptr.vmem [resolvable:$true] %s15
      %18 = dma.hbm_to_vmem [thread:$0]  %s0, 256, %s16, [#allocation3]
    $region5: #{tpu_custom_call.1} parent=1 // pred_fallthru
      _
    // Predicated region
    $region6: #{tpu_custom_call.1} parent=1 // pred_check
      _
    $region7: #{tpu_custom_call.1} parent=1 // pred_check_branch
      %20 = sbr.rel (0) target = $region9
    $region8: #{tpu_custom_call.1} parent=1 // pred_region
      _
    $region9: #{tpu_custom_call.1} parent=1 // pred_fallthru
      _
    // Predicated region
    $region10: #{tpu_custom_call.1} parent=1 // pred_check
      _
    $region11: #{tpu_custom_call.1} parent=1 // pred_check_branch
      %22 = sbr.rel (0) target = $region13
    $region12: #{tpu_custom_call.1} parent=1 // pred_region
      %23 = dma.done [#allocation3], 256
    $region13: #{tpu_custom_call.1} parent=1 // pred_fallthru
      _
    %v24 = vld [vmem:[#allocation2] sm:$0xff]
    %v25 = vld [vmem:[#allocation2 + $0x8] sm:$0xff]
    %v26 = vld [vmem:[%s1] sm:$0x3]
    %28 = vset.pattern.permute.xlu0 0
    %29 = vperm.xlu0 %28, %v26
    %v30 = vpop.permute.xlu0 %29
    %v32 = vunpack.c.l.s4 269488144
    %v33 = vunpack.c.0.s8 %v32
    %v34 = vlaneseq
    %v35 = vshrl.u32 %v34, 7
    %v36 = vsub.s32 %v33, %v35
    %v37 = vrot.slane %v30, %v36
    %v39 = vmul.f32 %v24, %v37
    %v40 = vmul.f32 %v25, %v37
    %41 = vst [vmem:[#allocation5] sm:$0xff] %v39
    %42 = vst [vmem:[#allocation5 + $0x8] sm:$0xff] %v40
    // Predicated region
    $region14: #{tpu_custom_call.1} parent=1 // pred_check
      _
    $region15: #{tpu_custom_call.1} parent=1 // pred_check_branch
      %44 = sbr.rel (0) target = $region17
    $region16: #{tpu_custom_call.1} parent=1 // pred_region
      %s46 = ssub.s32 256, 256
      %47 = vsyncadd [#allocation4], %s46
      %s49 = sshll.u32 [#allocation5], 4
      %s50 = int_to_ptr.vmem [resolvable:$true] %s49
      %52 = dma.vmem_to_hbm [thread:$0]  %s50, 256, %s2, [#allocation4]
    $region17: #{tpu_custom_call.1} parent=1 // pred_fallthru
      _
    // Predicated region
    $region18: #{tpu_custom_call.1} parent=1 // pred_check
      _
    $region19: #{tpu_custom_call.1} parent=1 // pred_check_branch
      %54 = sbr.rel (0) target = $region21
    $region20: #{tpu_custom_call.1} parent=1 // pred_region
      %55 = dma.done [#allocation4], 256
    $region21: #{tpu_custom_call.1} parent=1 // pred_fallthru
      _
    %56 = vsyncpa [#allocation3], 1
    %57 = vsyncpa [#allocation4], 1

</llo_original>
